<compile_context>
chip_gen: v7x
topology: tpu7x:2x2x1
jax: 0.10.0
libtpu: 0.0.40
codegen_flags: <defaults>
</compile_context>

<pallas_src>
import functools

import jax
import jax.numpy as jnp
from jax.experimental import pallas as pl
from jax.experimental.pallas import tpu as pltpu


def _ffn_kernel(x_ref, w1_ref, b1_ref, w2_ref, b2_ref, o_ref):
    # x_ref : (C_in, TL)  f32 (original dtype; cast to the MXU dtype in-kernel)
    # w1_ref: (H, C_in)   b1_ref: (H, 1)      [BN1-folded; biases always f32]
    # w2_ref: (C_out, H)  b2_ref: (C_out, 1)  [BN2-folded]
    # o_ref : (C_out, TL)
    x = x_ref[...]                                    # f32; the residual uses this exactly
    xc = x.astype(w1_ref.dtype)                       # MXU operand cast (VPU, hidden under MXU)
    h = jnp.dot(w1_ref[...], xc, preferred_element_type=jnp.float32)    # (H, TL), f32 acc
    h = jnp.maximum(h + b1_ref[...], 0.0)                               # bias + ReLU in f32
    y = jnp.dot(w2_ref[...], h.astype(w2_ref.dtype),
                preferred_element_type=jnp.float32)                     # (C_out, TL), f32 acc
    # drop_path == Identity (p=0.0); exact f32 residual with the original input
    o_ref[...] = (y + b2_ref[...] + x).astype(o_ref.dtype)


def _vmem_capacity_bytes(default=64 * 2**20):
    """Per-core VMEM capacity; conservative (v7x) default if the query is unavailable."""
    try:
        cap = getattr(pltpu.get_tpu_info(), "vmem_capacity_bytes", None)
        return int(cap) if cap else default
    except Exception:
        return default


@functools.lru_cache(maxsize=1)
def _buffered_pipeline_mode_supported():
    """Probe whether per-operand `pipeline_mode=pl.Buffered(n)` works on a top-level
    pallas_call with this jax/libtpu.  Used to single-buffer resident weights and
    triple-buffer the streamed x tiles; anything else falls back to default 2-deep."""
    def _probe(x_ref, w_ref, b_ref, o_ref):
        o_ref[...] = (jnp.dot(w_ref[...], x_ref[...].astype(w_ref.dtype),
                              preferred_element_type=jnp.float32)
                      + b_ref[...]).astype(o_ref.dtype)

    try:
        f = pl.pallas_call(
            _probe,
            out_shape=jax.ShapeDtypeStruct((2, 8, 256), jnp.float32),
            grid=(2, 2),
            in_specs=[
                pl.BlockSpec((None, 8, 128), lambda b, l: (b, 0, l),
                             pipeline_mode=pl.Buffered(3)),
                pl.BlockSpec((8, 8), lambda b, l: (0, 0), pipeline_mode=pl.Buffered(1)),
                pl.BlockSpec((8, 1), lambda b, l: (0, 0), pipeline_mode=pl.Buffered(1)),
            ],
            out_specs=pl.BlockSpec((None, 8, 128), lambda b, l: (b, 0, l)),
            compiler_params=pltpu.CompilerParams(
                dimension_semantics=("parallel", "parallel")),
        )
        out = jax.block_until_ready(
            f(jnp.ones((2, 8, 256), jnp.float32),
              jnp.ones((8, 8), jnp.bfloat16),
              jnp.ones((8, 1), jnp.float32)))
        return bool(jnp.allclose(out, 9.0))   # ones @ ones over K=8, + bias 1
    except Exception:
        return False


def ffn_pallas(x_bcl, params, *, eps=1e-5, tile_l=2048, use_bf16=True, out_dtype=None,
               single_buffer_weights=True, x_buffer_count=3):
    """x_bcl: (B, C_in, L) float32 (PyTorch NCL layout).  params: PyTorch-shaped dict.

    Sweep knobs: tile_l (1024-4096), x_buffer_count (2 vs 3), out_dtype.
    """
    B, C_in, L = x_bcl.shape

    # ---- fold BatchNorm (eval mode) into the 1x1 convs (glue / param setup) ----
    w1 = params["fc1_w"][:, :, 0]          # (H, C_in)
    b1 = params["fc1_b"]                   # (H,)
    w2 = params["fc2_w"][:, :, 0]          # (C_out, H)
    b2 = params["fc2_b"]                   # (C_out,)

    a1 = params["bn1_gamma"] / jnp.sqrt(params["bn1_var"] + eps)
    b1e = (b1 - params["bn1_mean"]) * a1 + params["bn1_beta"]           # (H,)
    w1e = w1 * a1[:, None]                                              # (H, C_in)

    a2 = params["bn2_gamma"] / jnp.sqrt(params["bn2_var"] + eps)
    b2e = (b2 - params["bn2_mean"]) * a2 + params["bn2_beta"]           # (C_out,)
    w2e = w2 * a2[:, None]                                              # (C_out, H)

    H = w1e.shape[0]
    C_out = w2e.shape[0]
    assert C_out == C_in, "residual connection requires out_features == in_features"

    # ---- dtypes: bf16 MXU operands (weights; x is cast in-kernel), f32 bias/epilogue ----
    cdtype = jnp.bfloat16 if use_bf16 else x_bcl.dtype
    if out_dtype is None:
        out_dtype = jnp.bfloat16 if use_bf16 else x_bcl.dtype
    w1c = w1e.astype(cdtype)
    w2c = w2e.astype(cdtype)
    b1c = b1e[:, None].astype(jnp.float32)                              # (H, 1)
    b2c = b2e[:, None].astype(jnp.float32)                              # (C_out, 1)

    # ---- choose the L tile: lane-dense (multiple of 128), or all of L if it fits ----
    if L <= tile_l:
        tl = L                                       # single full-width block (always legal)
    else:
        tl = max(128, (tile_l // 128) * 128)
    vmem_cap = _vmem_capacity_bytes()
    dual_tc_likely = vmem_cap <= 64 * 2**20          # v7x: 64 MiB VMEM/TC, 2 TCs per chip
    # Only on dual-TC chips: keep >= 2 grid steps so both TensorCores get work.
    if dual_tc_likely and B * pl.cdiv(L, tl) < 2 and L >= 256:
        tl = max(128, ((tl // 2) // 128) * 128)
    num_l = pl.cdiv(L, tl)
    # Ragged tail (L % tl != 0) is handled by the pipeline itself: no reduction along L,
    # so undefined columns of the tail input block never pollute valid columns, and
    # out-of-bounds output writes are masked.  No pad / slice HBM passes.

    # ---- per-operand buffering (feature-probed; falls back to default double-buffer) ----
    want_pm = single_buffer_weights or (x_buffer_count not in (None, 2))
    use_pm = want_pm and _buffered_pipeline_mode_supported()
    w_bufs = 1 if (use_pm and single_buffer_weights) else 2
    x_bufs = int(x_buffer_count) if (use_pm and x_buffer_count not in (None, 2)) else 2

    def _spec(shape, index_map, bufs):
        if use_pm and bufs != 2:
            return pl.BlockSpec(shape, index_map, pipeline_mode=pl.Buffered(bufs))
        return pl.BlockSpec(shape, index_map)

    # ---- VMEM budget & limit (headroom for compiler scratch; >64 MiB OK on v5e/v6e) ----
    wt_b = jnp.dtype(cdtype).itemsize
    x_b = jnp.dtype(x_bcl.dtype).itemsize
    out_b = jnp.dtype(out_dtype).itemsize
    vmem_need = (
        x_bufs * C_in * tl * x_b
        + 2 * C_out * tl * out_b
        + w_bufs * (H * C_in + C_out * H) * wt_b
        + w_bufs * (H + C_out) * 4
    )
    vmem_ceiling = max(16 * 2**20, vmem_cap - 16 * 2**20)
    vmem_limit = int(min(vmem_ceiling, max(16 * 2**20, vmem_need + (4 << 20))))

    flops = 2 * B * L * (C_in * H + H * C_out)
    bytes_accessed = int(
        B * C_in * L * x_b                  # x (read once, f32, no pad pass)
        + B * C_out * L * out_b             # out (bf16 by default)
        + (H * C_in + C_out * H) * wt_b     # weights
        + (H + C_out) * 4                   # biases
    )
    cost = pl.CostEstimate(flops=flops, transcendentals=0, bytes_accessed=bytes_accessed)

    out = pl.pallas_call(
        _ffn_kernel,
        out_shape=jax.ShapeDtypeStruct((B, C_out, L), out_dtype),
        grid_spec=pltpu.PrefetchScalarGridSpec(
            num_scalar_prefetch=0,
            grid=(B, num_l),
            in_specs=[
                _spec((None, C_in, tl), lambda b, l: (b, 0, l), x_bufs),   # x (NCL, f32)
                _spec((H, C_in), lambda b, l: (0, 0), w_bufs),             # W1 (BN-folded)
                _spec((H, 1), lambda b, l: (0, 0), w_bufs),                # b1 (f32)
                _spec((C_out, H), lambda b, l: (0, 0), w_bufs),            # W2 (BN-folded)
                _spec((C_out, 1), lambda b, l: (0, 0), w_bufs),            # b2 (f32)
            ],
            out_specs=pl.BlockSpec((None, C_out, tl), lambda b, l: (b, 0, l)),
        ),
        compiler_params=pltpu.CompilerParams(
            dimension_semantics=("parallel", "parallel"),
            vmem_limit_bytes=vmem_limit,
        ),
        cost_estimate=cost,
    )(x_bcl, w1c, b1c, w2c, b2c)
    return out


def ffn_reference(x_bcl, params, *, eps=1e-5):
    """Pure-JAX reference of the PyTorch eval-mode forward."""
    w1 = params["fc1_w"][:, :, 0]; b1 = params["fc1_b"]
    w2 = params["fc2_w"][:, :, 0]; b2 = params["fc2_b"]
    h = jnp.einsum("hc,bcl->bhl", w1, x_bcl) + b1[None, :, None]
    h = (h - params["bn1_mean"][None, :, None]) / jnp.sqrt(params["bn1_var"] + eps)[None, :, None]
    h = h * params["bn1_gamma"][None, :, None] + params["bn1_beta"][None, :, None]
    h = jnp.maximum(h, 0.0)
    y = jnp.einsum("oh,bhl->bol", w2, h) + b2[None, :, None]
    y = (y - params["bn2_mean"][None, :, None]) / jnp.sqrt(params["bn2_var"] + eps)[None, :, None]
    y = y * params["bn2_gamma"][None, :, None] + params["bn2_beta"][None, :, None]
    return y + x_bcl


def make_params(key, in_features, hidden_features, out_features):
    ks = jax.random.split(key, 8)
    return {
        "fc1_w": 0.05 * jax.random.normal(ks[0], (hidden_features, in_features, 1), jnp.float32),
        "fc1_b": 0.05 * jax.random.normal(ks[1], (hidden_features,), jnp.float32),
        "fc2_w": 0.05 * jax.random.normal(ks[2], (out_features, hidden_features, 1), jnp.float32),
        "fc2_b": 0.05 * jax.random.normal(ks[3], (out_features,), jnp.float32),
        "bn1_gamma": 1.0 + 0.1 * jax.random.normal(ks[4], (hidden_features,), jnp.float32),
        "bn1_beta": 0.1 * jax.random.normal(ks[5], (hidden_features,), jnp.float32),
        "bn1_mean": 0.1 * jax.random.normal(ks[6], (hidden_features,), jnp.float32),
        "bn1_var": jnp.abs(1.0 + 0.1 * jax.random.normal(ks[7], (hidden_features,), jnp.float32)),
        "bn2_gamma": 1.0 + 0.1 * jax.random.normal(ks[4], (out_features,), jnp.float32),
        "bn2_beta": 0.1 * jax.random.normal(ks[5], (out_features,), jnp.float32),
        "bn2_mean": 0.1 * jax.random.normal(ks[6], (out_features,), jnp.float32),
        "bn2_var": jnp.abs(1.0 + 0.1 * jax.random.normal(ks[7], (out_features,), jnp.float32)),
    }


if __name__ == "__main__":
    key = jax.random.PRNGKey(0)
    k_x, k_p = jax.random.split(key)

    B, C, L, HID = 2, 128, 256, 256           # small NCL input (matches Conv1d layout)
    x = jax.random.normal(k_x, (B, C, L), jnp.float32)
    params = make_params(k_p, in_features=C, hidden_features=HID, out_features=C)
    ref = ffn_reference(x, params)

    # f32 MXU-operand, f32-output path: faithful to the eval-mode PyTorch forward.
    out_f32 = jax.jit(functools.partial(ffn_pallas, use_bf16=False))(x, params)
    out_f32 = jax.block_until_ready(out_f32)
    assert out_f32.shape == (B, C, L) and out_f32.dtype == jnp.float32
    assert jnp.allclose(out_f32, ref, atol=1e-3, rtol=1e-3), "f32 mismatch vs reference"

    # Perf default: bf16 MXU operands + bf16 output, f32 accumulation / epilogue / residual.
    out_bf16 = jax.jit(ffn_pallas)(x, params)
    out_bf16 = jax.block_until_ready(out_bf16)
    assert out_bf16.shape == (B, C, L) and out_bf16.dtype == jnp.bfloat16
    assert jnp.allclose(out_bf16.astype(jnp.float32), ref, atol=5e-2, rtol=5e-2), \
        "bf16 mismatch vs reference"

    # Multi-tile grid along L (exercises the (B, num_l) grid with resident weights).
    L2 = 1024
    x2 = jax.random.normal(k_x, (B, C, L2), jnp.float32)
    ref2 = ffn_reference(x2, params)
    out2 = jax.jit(functools.partial(ffn_pallas, tile_l=256))(x2, params)
    out2 = jax.block_until_ready(out2)
    assert out2.shape == (B, C, L2)
    assert jnp.allclose(out2.astype(jnp.float32), ref2, atol=5e-2, rtol=5e-2), \
        "multi-tile mismatch vs reference"

    print("KERNEL_OK")
</pallas_src>

<mosaic_0001>
module attributes {stable_mosaic.version = 11 : i64} {
  func.func @_ffn_kernel(%arg0: i32, %arg1: i32, %arg2: memref<1x128x256xf32, #tpu.memory_space<vmem>>, %arg3: memref<256x128xf32, #tpu.memory_space<vmem>>, %arg4: memref<256x1xf32, #tpu.memory_space<vmem>>, %arg5: memref<128x256xf32, #tpu.memory_space<vmem>>, %arg6: memref<128x1xf32, #tpu.memory_space<vmem>>, %arg7: memref<1x128x256xf32, #tpu.memory_space<vmem>>) attributes {dimension_semantics = [#tpu.dimension_semantics<parallel>, #tpu.dimension_semantics<parallel>], iteration_bounds = array<i64: 2, 1>, scalar_prefetch = 0 : i64, scratch_operands = 0 : i64, tpu.core_type = #tpu.core_type<tc>, window_params = [{transform_indices = @transform_0, window_bounds = array<i64: 1, 128, 256>}, {pipeline_mode = #tpu.pipeline_mode<synchronous>, transform_indices = @transform_1, window_bounds = array<i64: 256, 128>}, {pipeline_mode = #tpu.pipeline_mode<synchronous>, transform_indices = @transform_2, window_bounds = array<i64: 256, 1>}, {pipeline_mode = #tpu.pipeline_mode<synchronous>, transform_indices = @transform_3, window_bounds = array<i64: 128, 256>}, {pipeline_mode = #tpu.pipeline_mode<synchronous>, transform_indices = @transform_4, window_bounds = array<i64: 128, 1>}, {transform_indices = @transform_5, window_bounds = array<i64: 1, 128, 256>}]} {
    %c0 = arith.constant 0 : index
    %c0_0 = arith.constant 0 : index
    %c0_1 = arith.constant 0 : index
    %0 = vector.load %arg2[%c0, %c0_0, %c0_1] : memref<1x128x256xf32, #tpu.memory_space<vmem>>, vector<1x128x256xf32>
    %1 = vector.shape_cast %0 : vector<1x128x256xf32> to vector<128x256xf32>
    %c0_2 = arith.constant 0 : index
    %c0_3 = arith.constant 0 : index
    %2 = vector.load %arg3[%c0_2, %c0_3] : memref<256x128xf32, #tpu.memory_space<vmem>>, vector<256x128xf32>
    %cst = arith.constant dense<0.000000e+00> : vector<256x256xf32>
    %3 = tpu.matmul %2, %1, %cst {dimension_numbers = #tpu.dot_dimension_numbers<[1], [0], [0], [1], [0, 0, 1, 1], [], []>} : vector<256x128xf32>, vector<128x256xf32>, vector<256x256xf32> -> vector<256x256xf32>
    %c0_4 = arith.constant 0 : index
    %c0_5 = arith.constant 0 : index
    %4 = vector.load %arg4[%c0_4, %c0_5] : memref<256x1xf32, #tpu.memory_space<vmem>>, vector<256x1xf32>
    %5 = vector.broadcast %4 : vector<256x1xf32> to vector<256x256xf32>
    %6 = arith.addf %3, %5 : vector<256x256xf32>
    %cst_6 = arith.constant 0.000000e+00 : f32
    %7 = vector.broadcast %cst_6 : f32 to vector<256x256xf32>
    %8 = arith.maximumf %6, %7 : vector<256x256xf32>
    %c0_7 = arith.constant 0 : index
    %c0_8 = arith.constant 0 : index
    %9 = vector.load %arg5[%c0_7, %c0_8] : memref<128x256xf32, #tpu.memory_space<vmem>>, vector<128x256xf32>
    %cst_9 = arith.constant dense<0.000000e+00> : vector<128x256xf32>
    %10 = tpu.matmul %9, %8, %cst_9 {dimension_numbers = #tpu.dot_dimension_numbers<[1], [0], [0], [1], [0, 0, 1, 1], [], []>} : vector<128x256xf32>, vector<256x256xf32>, vector<128x256xf32> -> vector<128x256xf32>
    %c0_10 = arith.constant 0 : index
    %c0_11 = arith.constant 0 : index
    %11 = vector.load %arg6[%c0_10, %c0_11] : memref<128x1xf32, #tpu.memory_space<vmem>>, vector<128x1xf32>
    %12 = vector.broadcast %11 : vector<128x1xf32> to vector<128x256xf32>
    %13 = arith.addf %10, %12 : vector<128x256xf32>
    %14 = arith.addf %13, %1 : vector<128x256xf32>
    %c0_12 = arith.constant 0 : index
    %c0_13 = arith.constant 0 : index
    %c0_14 = arith.constant 0 : index
    %15 = vector.load %arg7[%c0_12, %c0_13, %c0_14] : memref<1x128x256xf32, #tpu.memory_space<vmem>>, vector<1x128x256xf32>
    %16 = vector.shape_cast %15 : vector<1x128x256xf32> to vector<128x256xf32>
    %17 = vector.shape_cast %14 : vector<128x256xf32> to vector<1x128x256xf32>
    tpu.vector_store %arg7[%c0_12, %c0_13, %c0_14], %17 {strides = array<i32>} : memref<1x128x256xf32, #tpu.memory_space<vmem>>, vector<1x128x256xf32>,
    return
  }
  func.func @transform_0(%arg0: i32, %arg1: i32) -> (i32, i32, i32) {
    %c0_i32 = arith.constant 0 : i32
    %c0_i32_0 = arith.constant 0 : i32
    return %arg0, %c0_i32, %arg1 : i32, i32, i32
  }
  func.func @transform_1(%arg0: i32, %arg1: i32) -> (i32, i32) {
    %c0_i32 = arith.constant 0 : i32
    %c0_i32_0 = arith.constant 0 : i32
    %c0_i32_1 = arith.constant 0 : i32
    return %c0_i32, %c0_i32_0 : i32, i32
  }
  func.func @transform_2(%arg0: i32, %arg1: i32) -> (i32, i32) {
    %c0_i32 = arith.constant 0 : i32
    %c0_i32_0 = arith.constant 0 : i32
    %c0_i32_1 = arith.constant 0 : i32
    return %c0_i32, %c0_i32_0 : i32, i32
  }
  func.func @transform_3(%arg0: i32, %arg1: i32) -> (i32, i32) {
    %c0_i32 = arith.constant 0 : i32
    %c0_i32_0 = arith.constant 0 : i32
    %c0_i32_1 = arith.constant 0 : i32
    return %c0_i32, %c0_i32_0 : i32, i32
  }
  func.func @transform_4(%arg0: i32, %arg1: i32) -> (i32, i32) {
    %c0_i32 = arith.constant 0 : i32
    %c0_i32_0 = arith.constant 0 : i32
    %c0_i32_1 = arith.constant 0 : i32
    return %c0_i32, %c0_i32_0 : i32, i32
  }
  func.func @transform_5(%arg0: i32, %arg1: i32) -> (i32, i32, i32) {
    %c0_i32 = arith.constant 0 : i32
    %c0_i32_0 = arith.constant 0 : i32
    return %arg0, %c0_i32, %arg1 : i32, i32, i32
  }
}

</mosaic_0001>

<llo_original>
// kernel: ffn_pallas.1
$region0: #{ffn_pallas.1}
  #allocation0 [shape = 'u32[]', space=smem, size = 0x4, offset = 0x4, fixed_abs, tag = 'smem constant byte address 0x4 - core index']
  #allocation1 [shape = 'u32[144,128]{1,0:T(1,128)}', space=vmem, size = 0x12000, scoped, tag = 'internal scratch']
  %s0 = inlined_call_operand.vmem [shape: f32[2,128,256], index: 0, kind: input, shape index: {}]
  %s1 = inlined_call_operand.vmem [shape: f32[256,128], index: 1, kind: input, shape index: {}]
  %s2 = inlined_call_operand.vmem [shape: f32[256,1], index: 2, kind: input, shape index: {}]
  %s3 = inlined_call_operand.vmem [shape: f32[128,256], index: 3, kind: input, shape index: {}]
  %s4 = inlined_call_operand.vmem [shape: f32[128,1], index: 4, kind: input, shape index: {}]
  %s5 = inlined_call_operand.hbm [shape: f32[2,128,256], index: 5, kind: output, shape index: {}]
  %s6 = sld [smem:[#allocation0]]
  $region53: #{ffn_pallas.1} parent=0
    _
  %s8 = ssub.s32 1, %s6
  %s9 = scalar_select 0, %s8, %s6
  $region1: #{ffn_pallas.1} parent=0
    #allocation2 [shape = 'u8[262144]{0}', space=vmem, size = 0x40000, scoped, tag = 'output window, operand 0']
    #allocation3 [shape = 's32[2]{0}', space=sflag, size = 0x8, scoped, tag = 'scoped memory for ffn_pallas.1']
    %10 = vsyncpa [#allocation3], 0
    %s11 = scalar_lea.sflag [#allocation3], 1
    %12 = vsyncpa %s11, 0
    loop: start=0, step=1, limit=4
    $region2: #{ffn_pallas.1} parent=1 // loop_pre_header
      _
    $region3: #{ffn_pallas.1} parent=1 // loop_header
      %s14 = sphi 0, %s18
      %p15 = scmp.ge.s32.totalorder %s14, 4
      %s21 = sphi 0, %s33
      %s22 = sphi 0, %s29
      %s23 = sphi 0, %s21
      %s24 = sphi 0, %s22
      %s25 = sphi 0, %s23
      %s26 = sphi 0, %s24
      %s38 = sphi 0, %s40
      %s41 = sphi 0, %s38
      %s42 = sphi 0, %s41
      %s58 = sphi 0, %s42
      %s62 = sphi 0, %s62
      %s64 = sphi 0, %s62
      %s65 = sphi 0, %s64
      %s79 = sphi 0, %s65
      %s83 = sphi 0, %s83
      %s85 = sphi 0, %s83
      %s86 = sphi 0, %s85
      %s100 = sphi 0, %s86
      %s104 = sphi 0, %s104
      %s106 = sphi 0, %s104
      %s107 = sphi 0, %s106
      %s121 = sphi 0, %s107
      %s125 = sphi 0, %s125
      %s127 = sphi 0, %s125
      %s128 = sphi 0, %s127
      %s142 = sphi 0, %s128
      %s150 = sphi 0, %s152
      %s153 = sphi 0, %s150
      %s154 = sphi 0, %s153
      %s170 = sphi 0, %s154
    $region4: #{ffn_pallas.1} parent=1 // loop_header_branch
      %17 = sbr.rel (%p15) target = $region8
    $region5: #{ffn_pallas.1} parent=1 // loop_body
      %s19 = ssub.s32 %s14, 1
      %s20 = ssub.s32 %s14, 2
      %s27 = sadd.s32 1, %s22
      %p28 = scmp.ge.s32.totalorder %s27, 1
      %s29 = scalar_select %p28, 0, %s27
      %s30 = sadd.s32 1, %s21
      %s31 = scalar_select %p28, %s30, %s21
      %p32 = scmp.ge.s32.totalorder %s31, 2
      %s33 = scalar_select %p32, 0, %s31
      %s34 = ssub.s32 %s21, %s33
      %s35 = ssub.s32 %s22, %s29
      %s36 = sor.u32 %s34, %s35
      %p37 = scmp.eq.s32.totalorder %s36, 0
      %s39 = sadd.s32 %s38, 1
      %s40 = scalar_select %p37, %s38, %s39
      %p43 = pneg %p37
      %p44 = scmp.eq.s32.totalorder %s14, 1
      %p45 = por %p43, %p44
      %p46 = scmp.ne.s32.totalorder %s38, %s41
      %p47 = scmp.eq.s32.totalorder %s14, 0
      %p48 = por %p46, %p47
      %p49 = scmp.ne.s32.totalorder %s38, %s41
      %p50 = scmp.eq.s32.totalorder %s19, 1
      %p51 = por %p49, %p50
      %p52 = scmp.ne.s32.totalorder %s41, %s42
      %p53 = scmp.eq.s32.totalorder %s19, 0
      %p54 = por %p52, %p53
      %p55 = scmp.ne.s32.totalorder %s41, %s42
      %p56 = scmp.eq.s32.totalorder %s20, 1
      %p57 = por %p55, %p56
      %p59 = scmp.ne.s32.totalorder %s42, %s58
      %p60 = scmp.eq.s32.totalorder %s20, 0
      %p61 = por %p59, %p60
      %s63 = sadd.s32 %s62, 1
      %p66 = scmp.eq.s32.totalorder %s14, 1
      %p67 = scmp.ne.s32.totalorder %s62, %s64
      %p68 = scmp.eq.s32.totalorder %s14, 0
      %p69 = por %p67, %p68
      %p70 = scmp.ne.s32.totalorder %s62, %s64
      %p71 = scmp.eq.s32.totalorder %s19, 1
      %p72 = por %p70, %p71
      %p73 = scmp.ne.s32.totalorder %s64, %s65
      %p74 = scmp.eq.s32.totalorder %s19, 0
      %p75 = por %p73, %p74
      %p76 = scmp.ne.s32.totalorder %s64, %s65
      %p77 = scmp.eq.s32.totalorder %s20, 1
      %p78 = por %p76, %p77
      %p80 = scmp.ne.s32.totalorder %s65, %s79
      %p81 = scmp.eq.s32.totalorder %s20, 0
      %p82 = por %p80, %p81
      %s84 = sadd.s32 %s83, 1
      %p87 = scmp.eq.s32.totalorder %s14, 1
      %p88 = scmp.ne.s32.totalorder %s83, %s85
      %p89 = scmp.eq.s32.totalorder %s14, 0
      %p90 = por %p88, %p89
      %p91 = scmp.ne.s32.totalorder %s83, %s85
      %p92 = scmp.eq.s32.totalorder %s19, 1
      %p93 = por %p91, %p92
      %p94 = scmp.ne.s32.totalorder %s85, %s86
      %p95 = scmp.eq.s32.totalorder %s19, 0
      %p96 = por %p94, %p95
      %p97 = scmp.ne.s32.totalorder %s85, %s86
      %p98 = scmp.eq.s32.totalorder %s20, 1
      %p99 = por %p97, %p98
      %p101 = scmp.ne.s32.totalorder %s86, %s100
      %p102 = scmp.eq.s32.totalorder %s20, 0
      %p103 = por %p101, %p102
      %s105 = sadd.s32 %s104, 1
      %p108 = scmp.eq.s32.totalorder %s14, 1
      %p109 = scmp.ne.s32.totalorder %s104, %s106
      %p110 = scmp.eq.s32.totalorder %s14, 0
      %p111 = por %p109, %p110
      %p112 = scmp.ne.s32.totalorder %s104, %s106
      %p113 = scmp.eq.s32.totalorder %s19, 1
      %p114 = por %p112, %p113
      %p115 = scmp.ne.s32.totalorder %s106, %s107
      %p116 = scmp.eq.s32.totalorder %s19, 0
      %p117 = por %p115, %p116
      %p118 = scmp.ne.s32.totalorder %s106, %s107
      %p119 = scmp.eq.s32.totalorder %s20, 1
      %p120 = por %p118, %p119
      %p122 = scmp.ne.s32.totalorder %s107, %s121
      %p123 = scmp.eq.s32.totalorder %s20, 0
      %p124 = por %p122, %p123
      %s126 = sadd.s32 %s125, 1
      %p129 = scmp.eq.s32.totalorder %s14, 1
      %p130 = scmp.ne.s32.totalorder %s125, %s127
      %p131 = scmp.eq.s32.totalorder %s14, 0
      %p132 = por %p130, %p131
      %p133 = scmp.ne.s32.totalorder %s125, %s127
      %p134 = scmp.eq.s32.totalorder %s19, 1
      %p135 = por %p133, %p134
      %p136 = scmp.ne.s32.totalorder %s127, %s128
      %p137 = scmp.eq.s32.totalorder %s19, 0
      %p138 = por %p136, %p137
      %p139 = scmp.ne.s32.totalorder %s127, %s128
      %p140 = scmp.eq.s32.totalorder %s20, 1
      %p141 = por %p139, %p140
      %p143 = scmp.ne.s32.totalorder %s128, %s142
      %p144 = scmp.eq.s32.totalorder %s20, 0
      %p145 = por %p143, %p144
      %s146 = ssub.s32 %s21, %s33
      %s147 = ssub.s32 %s22, %s29
      %s148 = sor.u32 %s146, %s147
      %p149 = scmp.eq.s32.totalorder %s148, 0
      %s151 = sadd.s32 %s150, 1
      %s152 = scalar_select %p149, %s150, %s151
      %p155 = pneg %p149
      %p156 = scmp.eq.s32.totalorder %s14, 1
      %p157 = por %p155, %p156
      %p158 = scmp.ne.s32.totalorder %s150, %s153
      %p159 = scmp.eq.s32.totalorder %s14, 0
      %p160 = por %p158, %p159
      %p161 = scmp.ne.s32.totalorder %s150, %s153
      %p162 = scmp.eq.s32.totalorder %s19, 1
      %p163 = por %p161, %p162
      %p164 = scmp.ne.s32.totalorder %s153, %s154
      %p165 = scmp.eq.s32.totalorder %s19, 0
      %p166 = por %p164, %p165
      %p167 = scmp.ne.s32.totalorder %s153, %s154
      %p168 = scmp.eq.s32.totalorder %s20, 1
      %p169 = por %p167, %p168
      %p171 = scmp.ne.s32.totalorder %s154, %s170
      %p172 = scmp.eq.s32.totalorder %s20, 0
      %p173 = por %p171, %p172
      %p174 = scmp.le.s32.totalorder 1, %s14
      %p175 = scmp.lt.s32.totalorder %s14, 3
      %p176 = pnand %p174, %p175
      %p177 = pneg %p176
      // Predicated region
      $region9: #{ffn_pallas.1} parent=5 // pred_check
        _
      $region10: #{ffn_pallas.1} parent=5 // pred_check_branch
        %179 = sbr.rel (%p176) target = $region12
      $region11: #{ffn_pallas.1} parent=5 // pred_region
        %s180 = ssub.s32 %s14, 1
        // Predicated region
        $region13: #{ffn_pallas.1} parent=11 // pred_check
          %p181 = pneg %p75
        $region14: #{ffn_pallas.1} parent=11 // pred_check_branch
          %183 = sbr.rel (%p181) target = $region16
        $region15: #{ffn_pallas.1} parent=11 // pred_region
          _
        $region16: #{ffn_pallas.1} parent=11 // pred_fallthru
          _
        // Predicated region
        $region17: #{ffn_pallas.1} parent=11 // pred_check
          %p184 = pneg %p96
        $region18: #{ffn_pallas.1} parent=11 // pred_check_branch
          %186 = sbr.rel (%p184) target = $region20
        $region19: #{ffn_pallas.1} parent=11 // pred_region
          _
        $region20: #{ffn_pallas.1} parent=11 // pred_fallthru
          _
        // Predicated region
        $region21: #{ffn_pallas.1} parent=11 // pred_check
          %p187 = pneg %p117
        $region22: #{ffn_pallas.1} parent=11 // pred_check_branch
          %189 = sbr.rel (%p187) target = $region24
        $region23: #{ffn_pallas.1} parent=11 // pred_region
          _
        $region24: #{ffn_pallas.1} parent=11 // pred_fallthru
          _
        // Predicated region
        $region25: #{ffn_pallas.1} parent=11 // pred_check
          %p190 = pneg %p138
        $region26: #{ffn_pallas.1} parent=11 // pred_check_branch
          %192 = sbr.rel (%p190) target = $region28
        $region27: #{ffn_pallas.1} parent=11 // pred_region
          _
        $region28: #{ffn_pallas.1} parent=11 // pred_fallthru
          _
      $region12: #{ffn_pallas.1} parent=5 // pred_fallthru
        _
      %p193 = scmp.lt.s32.totalorder %s14, 2
      // Predicated region
      $region29: #{ffn_pallas.1} parent=5 // pred_check
        %p194 = pneg %p193
      $region30: #{ffn_pallas.1} parent=5 // pred_check_branch
        %196 = sbr.rel (%p194) target = $region32
      $region31: #{ffn_pallas.1} parent=5 // pred_region
        // Predicated region
        $region33: #{ffn_pallas.1} parent=31 // pred_check
          %p197 = pneg %p48
        $region34: #{ffn_pallas.1} parent=31 // pred_check_branch
          %199 = sbr.rel (%p197) target = $region36
        $region35: #{ffn_pallas.1} parent=31 // pred_region
          %s200 = smul.u32 2, %s22
          %p201 = scmp.lt.s32.totalorder %s21, 1
          %s202 = scalar_select %p201, %s21, 1
          %p203 = scmp.lt.s32.totalorder %s200, 1
          %s204 = scalar_select %p203, %s200, 1
          %s205 = smul.addr %s202, 32
          %s206 = sadd.s32 %s204, %s205
          %s207 = smul.addr %s206, 8
          %s208 = scalar_lea.vmem %s0, %s207
          %s209 = smul.u32 2, %s22
        $region36: #{ffn_pallas.1} parent=31 // pred_fallthru
          _
      $region32: #{ffn_pallas.1} parent=5 // pred_fallthru
        _
      %p210 = scmp.le.s32.totalorder 1, %s14
      %p211 = scmp.lt.s32.totalorder %s14, 3
      %p212 = pnand %p210, %p211
      %p213 = pneg %p212
      // Predicated region
      $region37: #{ffn_pallas.1} parent=5 // pred_check
        _
      $region38: #{ffn_pallas.1} parent=5 // pred_check_branch
        %215 = sbr.rel (%p212) target = $region40
      $region39: #{ffn_pallas.1} parent=5 // pred_region
        %s216 = ssub.s32 %s14, 1
        %s217 = smul.u32 2, %s24
        %p218 = scmp.lt.s32.totalorder %s23, 1
        %s219 = scalar_select %p218, %s23, 1
        %p220 = scmp.lt.s32.totalorder %s217, 1
        %s221 = scalar_select %p220, %s217, 1
        %s222 = smul.addr %s219, 32
        %s223 = sadd.s32 %s221, %s222
        %s224 = smul.addr %s223, 8
        %s225 = scalar_lea.vmem %s0, %s224
        %p226 = pneg %p54
        %p227 = pneg %p51
        %p228 = pneg %p75
        %p229 = pneg %p72
        %p230 = pneg %p96
        %p231 = pneg %p93
        %p232 = pneg %p117
        %p233 = pneg %p114
        %p234 = pneg %p138
        %p235 = pneg %p135
        %p236 = pneg %p166
        %p237 = pneg %p163
        %s238 = sand.u32 %s153, 1
        %s239 = scalar_lea.sflag [#allocation3], %s238
        %s240 = sand.u32 %s153, 1
        %s241 = smul.addr %s240, 256
        %s242 = scalar_lea.vmem [#allocation2], %s241
        %s243 = smul.u32 2, %s24
        %p244 = scmp.lt.s32.totalorder %s23, 1
        %s245 = scalar_select %p244, %s23, 1
        %p246 = scmp.lt.s32.totalorder %s243, 1
        %s247 = scalar_select %p246, %s243, 1
        %s248 = smul.addr %s245, 32
        %s249 = sadd.s32 %s247, %s248
        %s250 = smul.addr %s249, 8
        %s251 = scalar_lea.vmem %s0, %s250
        %s252 = smul.u32 2, %s24
        %s253 = smul.u32 2, %s24
        %v254 = vld [vmem:[%s251] sm:$0xff]
        %v255 = vld [vmem:[%s251 + $0x8] sm:$0xff]
        %v256 = vld [vmem:[%s251 + $0x10] sm:$0xff]
        %v257 = vld [vmem:[%s251 + $0x18] sm:$0xff]
        %v258 = vld [vmem:[%s251 + $0x20] sm:$0xff]
        %v259 = vld [vmem:[%s251 + $0x28] sm:$0xff]
        %v260 = vld [vmem:[%s251 + $0x30] sm:$0xff]
        %v261 = vld [vmem:[%s251 + $0x38] sm:$0xff]
        %v262 = vld [vmem:[%s251 + $0x40] sm:$0xff]
        %v263 = vld [vmem:[%s251 + $0x48] sm:$0xff]
        %v264 = vld [vmem:[%s251 + $0x50] sm:$0xff]
        %v265 = vld [vmem:[%s251 + $0x58] sm:$0xff]
        %v266 = vld [vmem:[%s251 + $0x60] sm:$0xff]
        %v267 = vld [vmem:[%s251 + $0x68] sm:$0xff]
        %v268 = vld [vmem:[%s251 + $0x70] sm:$0xff]
        %v269 = vld [vmem:[%s251 + $0x78] sm:$0xff]
        %v270 = vld [vmem:[%s251 + $0x80] sm:$0xff]
        %v271 = vld [vmem:[%s251 + $0x88] sm:$0xff]
        %v272 = vld [vmem:[%s251 + $0x90] sm:$0xff]
        %v273 = vld [vmem:[%s251 + $0x98] sm:$0xff]
        %v274 = vld [vmem:[%s251 + $0xa0] sm:$0xff]
        %v275 = vld [vmem:[%s251 + $0xa8] sm:$0xff]
        %v276 = vld [vmem:[%s251 + $0xb0] sm:$0xff]
        %v277 = vld [vmem:[%s251 + $0xb8] sm:$0xff]
        %v278 = vld [vmem:[%s251 + $0xc0] sm:$0xff]
        %v279 = vld [vmem:[%s251 + $0xc8] sm:$0xff]
        %v280 = vld [vmem:[%s251 + $0xd0] sm:$0xff]
        %v281 = vld [vmem:[%s251 + $0xd8] sm:$0xff]
        %v282 = vld [vmem:[%s251 + $0xe0] sm:$0xff]
        %v283 = vld [vmem:[%s251 + $0xe8] sm:$0xff]
        %v284 = vld [vmem:[%s251 + $0xf0] sm:$0xff]
        %v285 = vld [vmem:[%s251 + $0xf8] sm:$0xff]
        %v286 = vld [vmem:[%s1] sm:$0xff]
        %v287 = vld [vmem:[%s1 + $0x8] sm:$0xff]
        %v288 = vld [vmem:[%s1 + $0x10] sm:$0xff]
        %v289 = vld [vmem:[%s1 + $0x18] sm:$0xff]
        %v290 = vld [vmem:[%s1 + $0x20] sm:$0xff]
        %v291 = vld [vmem:[%s1 + $0x28] sm:$0xff]
        %v292 = vld [vmem:[%s1 + $0x30] sm:$0xff]
        %v293 = vld [vmem:[%s1 + $0x38] sm:$0xff]
        %v294 = vld [vmem:[%s1 + $0x40] sm:$0xff]
        %v295 = vld [vmem:[%s1 + $0x48] sm:$0xff]
        %v296 = vld [vmem:[%s1 + $0x50] sm:$0xff]
        %v297 = vld [vmem:[%s1 + $0x58] sm:$0xff]
        %v298 = vld [vmem:[%s1 + $0x60] sm:$0xff]
        %v299 = vld [vmem:[%s1 + $0x68] sm:$0xff]
        %v300 = vld [vmem:[%s1 + $0x70] sm:$0xff]
        %v301 = vld [vmem:[%s1 + $0x78] sm:$0xff]
        %v302 = vld [vmem:[%s1 + $0x80] sm:$0xff]
        %v303 = vld [vmem:[%s1 + $0x88] sm:$0xff]
        %v304 = vld [vmem:[%s1 + $0x90] sm:$0xff]
        %v305 = vld [vmem:[%s1 + $0x98] sm:$0xff]
        %v306 = vld [vmem:[%s1 + $0xa0] sm:$0xff]
        %v307 = vld [vmem:[%s1 + $0xa8] sm:$0xff]
        %v308 = vld [vmem:[%s1 + $0xb0] sm:$0xff]
        %v309 = vld [vmem:[%s1 + $0xb8] sm:$0xff]
        %v310 = vld [vmem:[%s1 + $0xc0] sm:$0xff]
        %v311 = vld [vmem:[%s1 + $0xc8] sm:$0xff]
        %v312 = vld [vmem:[%s1 + $0xd0] sm:$0xff]
        %v313 = vld [vmem:[%s1 + $0xd8] sm:$0xff]
        %v314 = vld [vmem:[%s1 + $0xe0] sm:$0xff]
        %v315 = vld [vmem:[%s1 + $0xe8] sm:$0xff]
        %v316 = vld [vmem:[%s1 + $0xf0] sm:$0xff]
        %v317 = vld [vmem:[%s1 + $0xf8] sm:$0xff]
        %v318 = vld [vmem:[%s2] sm:$0xff]
        %v319 = vld [vmem:[%s2 + $0x8] sm:$0xff]
        %v320 = vld [vmem:[%s2 + $0x10] sm:$0xff]
        %v321 = vld [vmem:[%s2 + $0x18] sm:$0xff]
        %v322 = vld [vmem:[%s2 + $0x20] sm:$0xff]
        %v323 = vld [vmem:[%s2 + $0x28] sm:$0xff]
        %v324 = vld [vmem:[%s2 + $0x30] sm:$0xff]
        %v325 = vld [vmem:[%s2 + $0x38] sm:$0xff]
        %v326 = vld [vmem:[%s2 + $0x40] sm:$0xff]
        %v327 = vld [vmem:[%s2 + $0x48] sm:$0xff]
        %v328 = vld [vmem:[%s2 + $0x50] sm:$0xff]
        %v329 = vld [vmem:[%s2 + $0x58] sm:$0xff]
        %v330 = vld [vmem:[%s2 + $0x60] sm:$0xff]
        %v331 = vld [vmem:[%s2 + $0x68] sm:$0xff]
        %v332 = vld [vmem:[%s2 + $0x70] sm:$0xff]
        %v333 = vld [vmem:[%s2 + $0x78] sm:$0xff]
        %v334 = vld [vmem:[%s2 + $0x80] sm:$0xff]
        %v335 = vld [vmem:[%s2 + $0x88] sm:$0xff]
        %v336 = vld [vmem:[%s2 + $0x90] sm:$0xff]
        %v337 = vld [vmem:[%s2 + $0x98] sm:$0xff]
        %v338 = vld [vmem:[%s2 + $0xa0] sm:$0xff]
        %v339 = vld [vmem:[%s2 + $0xa8] sm:$0xff]
        %v340 = vld [vmem:[%s2 + $0xb0] sm:$0xff]
        %v341 = vld [vmem:[%s2 + $0xb8] sm:$0xff]
        %v342 = vld [vmem:[%s2 + $0xc0] sm:$0xff]
        %v343 = vld [vmem:[%s2 + $0xc8] sm:$0xff]
        %v344 = vld [vmem:[%s2 + $0xd0] sm:$0xff]
        %v345 = vld [vmem:[%s2 + $0xd8] sm:$0xff]
        %v346 = vld [vmem:[%s2 + $0xe0] sm:$0xff]
        %v347 = vld [vmem:[%s2 + $0xe8] sm:$0xff]
        %v348 = vld [vmem:[%s2 + $0xf0] sm:$0xff]
        %v349 = vld [vmem:[%s2 + $0xf8] sm:$0xff]
        %351 = vset.pattern.permute.xlu0 0
        %352 = vperm.xlu0 %351, %v318
        %v353 = vpop.permute.xlu0 %352
        %356 = vset.pattern.permute.xlu0 0
        %357 = vperm.xlu0 %356, %v319
        %v358 = vpop.permute.xlu0 %357
        %361 = vset.pattern.permute.xlu0 0
        %362 = vperm.xlu0 %361, %v320
        %v363 = vpop.permute.xlu0 %362
        %366 = vset.pattern.permute.xlu0 0
        %367 = vperm.xlu0 %366, %v321
        %v368 = vpop.permute.xlu0 %367
        %371 = vset.pattern.permute.xlu0 0
        %372 = vperm.xlu0 %371, %v322
        %v373 = vpop.permute.xlu0 %372
        %376 = vset.pattern.permute.xlu0 0
        %377 = vperm.xlu0 %376, %v323
        %v378 = vpop.permute.xlu0 %377
        %381 = vset.pattern.permute.xlu0 0
        %382 = vperm.xlu0 %381, %v324
        %v383 = vpop.permute.xlu0 %382
        %386 = vset.pattern.permute.xlu0 0
        %387 = vperm.xlu0 %386, %v325
        %v388 = vpop.permute.xlu0 %387
        %391 = vset.pattern.permute.xlu0 0
        %392 = vperm.xlu0 %391, %v326
        %v393 = vpop.permute.xlu0 %392
        %396 = vset.pattern.permute.xlu0 0
        %397 = vperm.xlu0 %396, %v327
        %v398 = vpop.permute.xlu0 %397
        %401 = vset.pattern.permute.xlu0 0
        %402 = vperm.xlu0 %401, %v328
        %v403 = vpop.permute.xlu0 %402
        %406 = vset.pattern.permute.xlu0 0
        %407 = vperm.xlu0 %406, %v329
        %v408 = vpop.permute.xlu0 %407
        %411 = vset.pattern.permute.xlu0 0
        %412 = vperm.xlu0 %411, %v330
        %v413 = vpop.permute.xlu0 %412
        %416 = vset.pattern.permute.xlu0 0
        %417 = vperm.xlu0 %416, %v331
        %v418 = vpop.permute.xlu0 %417
        %421 = vset.pattern.permute.xlu0 0
        %422 = vperm.xlu0 %421, %v332
        %v423 = vpop.permute.xlu0 %422
        %426 = vset.pattern.permute.xlu0 0
        %427 = vperm.xlu0 %426, %v333
        %v428 = vpop.permute.xlu0 %427
        %431 = vset.pattern.permute.xlu0 0
        %432 = vperm.xlu0 %431, %v334
        %v433 = vpop.permute.xlu0 %432
        %436 = vset.pattern.permute.xlu0 0
        %437 = vperm.xlu0 %436, %v335
        %v438 = vpop.permute.xlu0 %437
        %441 = vset.pattern.permute.xlu0 0
        %442 = vperm.xlu0 %441, %v336
        %v443 = vpop.permute.xlu0 %442
        %446 = vset.pattern.permute.xlu0 0
        %447 = vperm.xlu0 %446, %v337
        %v448 = vpop.permute.xlu0 %447
        %451 = vset.pattern.permute.xlu0 0
        %452 = vperm.xlu0 %451, %v338
        %v453 = vpop.permute.xlu0 %452
        %456 = vset.pattern.permute.xlu0 0
        %457 = vperm.xlu0 %456, %v339
        %v458 = vpop.permute.xlu0 %457
        %461 = vset.pattern.permute.xlu0 0
        %462 = vperm.xlu0 %461, %v340
        %v463 = vpop.permute.xlu0 %462
        %466 = vset.pattern.permute.xlu0 0
        %467 = vperm.xlu0 %466, %v341
        %v468 = vpop.permute.xlu0 %467
        %471 = vset.pattern.permute.xlu0 0
        %472 = vperm.xlu0 %471, %v342
        %v473 = vpop.permute.xlu0 %472
        %476 = vset.pattern.permute.xlu0 0
        %477 = vperm.xlu0 %476, %v343
        %v478 = vpop.permute.xlu0 %477
        %481 = vset.pattern.permute.xlu0 0
        %482 = vperm.xlu0 %481, %v344
        %v483 = vpop.permute.xlu0 %482
        %486 = vset.pattern.permute.xlu0 0
        %487 = vperm.xlu0 %486, %v345
        %v488 = vpop.permute.xlu0 %487
        %491 = vset.pattern.permute.xlu0 0
        %492 = vperm.xlu0 %491, %v346
        %v493 = vpop.permute.xlu0 %492
        %496 = vset.pattern.permute.xlu0 0
        %497 = vperm.xlu0 %496, %v347
        %v498 = vpop.permute.xlu0 %497
        %501 = vset.pattern.permute.xlu0 0
        %502 = vperm.xlu0 %501, %v348
        %v503 = vpop.permute.xlu0 %502
        %506 = vset.pattern.permute.xlu0 0
        %507 = vperm.xlu0 %506, %v349
        %v508 = vpop.permute.xlu0 %507
        %510 = vmatprep.subr.mxu0 %v255
        %511 = vmatpush1.msra.mxu0 %v254
        %512 = vmatprep.subr.mxu0 %v257
        %513 = vmatpush1.msra.mxu0 %v256
        %514 = vmatprep.subr.mxu0 %v259
        %515 = vmatpush1.msra.mxu0 %v258
        %516 = vmatprep.subr.mxu0 %v261
        %517 = vmatpush1.msra.mxu0 %v260
        %518 = vmatprep.subr.mxu0 %v263
        %519 = vmatpush1.msra.mxu0 %v262
        %520 = vmatprep.subr.mxu0 %v265
        %521 = vmatpush1.msra.mxu0 %v264
        %522 = vmatprep.subr.mxu0 %v267
        %523 = vmatpush1.msra.mxu0 %v266
        %524 = vmatprep.subr.mxu0 %v269
        %525 = vmatpush1.msra.mxu0 %v268
        %526 = vmatprep.subr.mxu0 %v271
        %527 = vmatpush1.msra.mxu0 %v270
        %528 = vmatprep.subr.mxu0 %v273
        %529 = vmatpush1.msra.mxu0 %v272
        %530 = vmatprep.subr.mxu0 %v275
        %531 = vmatpush1.msra.mxu0 %v274
        %532 = vmatprep.subr.mxu0 %v277
        %533 = vmatpush1.msra.mxu0 %v276
        %534 = vmatprep.subr.mxu0 %v279
        %535 = vmatpush1.msra.mxu0 %v278
        %536 = vmatprep.subr.mxu0 %v281
        %537 = vmatpush1.msra.mxu0 %v280
        %538 = vmatprep.subr.mxu0 %v283
        %539 = vmatpush1.msra.mxu0 %v282
        %540 = vmatprep.subr.mxu0 %v285
        %541 = vmatpush1.msra.mxu0 %v284
        %542 = vmatprep.subr.mxu0 0.0
        %543 = vmatpush1.msra.mxu0 0.0
        %544 = vmatprep.subr.mxu0 0.0
        %545 = vmatpush1.msra.mxu0 0.0
        %546 = vmatprep.subr.mxu0 0.0
        %547 = vmatpush1.msra.mxu0 0.0
        %548 = vmatprep.subr.mxu0 0.0
        %549 = vmatpush1.msra.mxu0 0.0
        %550 = vmatprep.subr.mxu0 0.0
        %551 = vmatpush1.msra.mxu0 0.0
        %552 = vmatprep.subr.mxu0 0.0
        %553 = vmatpush1.msra.mxu0 0.0
        %554 = vmatprep.subr.mxu0 0.0
        %555 = vmatpush1.msra.mxu0 0.0
        %556 = vmatprep.subr.mxu0 0.0
        %557 = vmatpush1.msra.mxu0 0.0
        %558 = vmatprep.subr.mxu0 0.0
        %559 = vmatpush1.msra.mxu0 0.0
        %560 = vmatprep.subr.mxu0 0.0
        %561 = vmatpush1.msra.mxu0 0.0
        %562 = vmatprep.subr.mxu0 0.0
        %563 = vmatpush1.msra.mxu0 0.0
        %564 = vmatprep.subr.mxu0 0.0
        %565 = vmatpush1.msra.mxu0 0.0
        %566 = vmatprep.subr.mxu0 0.0
        %567 = vmatpush1.msra.mxu0 0.0
        %568 = vmatprep.subr.mxu0 0.0
        %569 = vmatpush1.msra.mxu0 0.0
        %570 = vmatprep.subr.mxu0 0.0
        %571 = vmatpush1.msra.mxu0 0.0
        %572 = vmatprep.subr.mxu0 0.0
        %573 = vmatpush1.msra.mxu0 0.0
        %574 = vmatprep.mubr.f32.mxu0 0.0
        %575 = vmatmul.mubr.f32.gmra.mrb[0].mxu0 %v286
        %v576 = vpop.f32.mrb[0].mxu0
        %v577 = vadd.f32 %v353, %v576
        %v578 = vpop.f32.mrb[0].mxu0
        %v579 = vadd.f32 %v353, %v578
        %580 = vmatprep.mubr.f32.mxu0 0.0
        %581 = vmatmul.mubr.f32.gmra.mrb[0].mxu0 %v287
        %v582 = vpop.f32.mrb[0].mxu0
        %v583 = vadd.f32 %v358, %v582
        %v584 = vpop.f32.mrb[0].mxu0
        %v585 = vadd.f32 %v358, %v584
        %586 = vmatprep.mubr.f32.mxu0 0.0
        %587 = vmatmul.mubr.f32.gmra.mrb[0].mxu0 %v288
        %v588 = vpop.f32.mrb[0].mxu0
        %v589 = vadd.f32 %v363, %v588
        %v590 = vpop.f32.mrb[0].mxu0
        %v591 = vadd.f32 %v363, %v590
        %592 = vmatprep.mubr.f32.mxu0 0.0
        %593 = vmatmul.mubr.f32.gmra.mrb[0].mxu0 %v289
        %v594 = vpop.f32.mrb[0].mxu0
        %v595 = vadd.f32 %v368, %v594
        %v596 = vpop.f32.mrb[0].mxu0
        %v597 = vadd.f32 %v368, %v596
        %598 = vmatprep.mubr.f32.mxu0 0.0
        %599 = vmatmul.mubr.f32.gmra.mrb[0].mxu0 %v290
        %v600 = vpop.f32.mrb[0].mxu0
        %v601 = vadd.f32 %v373, %v600
        %v602 = vpop.f32.mrb[0].mxu0
        %v603 = vadd.f32 %v373, %v602
        %604 = vmatprep.mubr.f32.mxu0 0.0
        %605 = vmatmul.mubr.f32.gmra.mrb[0].mxu0 %v291
        %v606 = vpop.f32.mrb[0].mxu0
        %v607 = vadd.f32 %v378, %v606
        %v608 = vpop.f32.mrb[0].mxu0
        %v609 = vadd.f32 %v378, %v608
        %610 = vmatprep.mubr.f32.mxu0 0.0
        %611 = vmatmul.mubr.f32.gmra.mrb[0].mxu0 %v292
        %v612 = vpop.f32.mrb[0].mxu0
        %v613 = vadd.f32 %v383, %v612
        %v614 = vpop.f32.mrb[0].mxu0
        %v615 = vadd.f32 %v383, %v614
        %616 = vmatprep.mubr.f32.mxu0 0.0
        %617 = vmatmul.mubr.f32.gmra.mrb[0].mxu0 %v293
        %v618 = vpop.f32.mrb[0].mxu0
        %v619 = vadd.f32 %v388, %v618
        %v620 = vpop.f32.mrb[0].mxu0
        %v621 = vadd.f32 %v388, %v620
        %622 = vmatprep.mubr.f32.mxu0 0.0
        %623 = vmatmul.mubr.f32.gmra.mrb[0].mxu0 %v294
        %v624 = vpop.f32.mrb[0].mxu0
        %v625 = vadd.f32 %v393, %v624
        %v626 = vpop.f32.mrb[0].mxu0
        %v627 = vadd.f32 %v393, %v626
        %628 = vmatprep.mubr.f32.mxu0 0.0
        %629 = vmatmul.mubr.f32.gmra.mrb[0].mxu0 %v295
        %v630 = vpop.f32.mrb[0].mxu0
        %v631 = vadd.f32 %v398, %v630
        %v632 = vpop.f32.mrb[0].mxu0
        %v633 = vadd.f32 %v398, %v632
        %634 = vmatprep.mubr.f32.mxu0 0.0
        %635 = vmatmul.mubr.f32.gmra.mrb[0].mxu0 %v296
        %v636 = vpop.f32.mrb[0].mxu0
        %v637 = vadd.f32 %v403, %v636
        %v638 = vpop.f32.mrb[0].mxu0
        %v639 = vadd.f32 %v403, %v638
        %640 = vmatprep.mubr.f32.mxu0 0.0
        %641 = vmatmul.mubr.f32.gmra.mrb[0].mxu0 %v297
        %v642 = vpop.f32.mrb[0].mxu0
        %v643 = vadd.f32 %v408, %v642
        %v644 = vpop.f32.mrb[0].mxu0
        %v645 = vadd.f32 %v408, %v644
        %646 = vmatprep.mubr.f32.mxu0 0.0
        %647 = vmatmul.mubr.f32.gmra.mrb[0].mxu0 %v298
        %v648 = vpop.f32.mrb[0].mxu0
        %v649 = vadd.f32 %v413, %v648
        %v650 = vpop.f32.mrb[0].mxu0
        %v651 = vadd.f32 %v413, %v650
        %652 = vmatprep.mubr.f32.mxu0 0.0
        %653 = vmatmul.mubr.f32.gmra.mrb[0].mxu0 %v299
        %v654 = vpop.f32.mrb[0].mxu0
        %v655 = vadd.f32 %v418, %v654
        %v656 = vpop.f32.mrb[0].mxu0
        %v657 = vadd.f32 %v418, %v656
        %658 = vmatprep.mubr.f32.mxu0 0.0
        %659 = vmatmul.mubr.f32.gmra.mrb[0].mxu0 %v300
        %v660 = vpop.f32.mrb[0].mxu0
        %v661 = vadd.f32 %v423, %v660
        %v662 = vpop.f32.mrb[0].mxu0
        %v663 = vadd.f32 %v423, %v662
        %664 = vmatprep.mubr.f32.mxu0 0.0
        %665 = vmatmul.mubr.f32.gmra.mrb[0].mxu0 %v301
        %v666 = vpop.f32.mrb[0].mxu0
        %v667 = vadd.f32 %v428, %v666
        %v668 = vpop.f32.mrb[0].mxu0
        %v669 = vadd.f32 %v428, %v668
        %670 = vmatprep.mubr.f32.mxu0 0.0
        %671 = vmatmul.mubr.f32.gmra.mrb[0].mxu0 %v302
        %v672 = vpop.f32.mrb[0].mxu0
        %v673 = vadd.f32 %v433, %v672
        %v674 = vpop.f32.mrb[0].mxu0
        %v675 = vadd.f32 %v433, %v674
        %676 = vmatprep.mubr.f32.mxu0 0.0
        %677 = vmatmul.mubr.f32.gmra.mrb[0].mxu0 %v303
        %v678 = vpop.f32.mrb[0].mxu0
        %v679 = vadd.f32 %v438, %v678
        %v680 = vpop.f32.mrb[0].mxu0
        %v681 = vadd.f32 %v438, %v680
        %682 = vmatprep.mubr.f32.mxu0 0.0
        %683 = vmatmul.mubr.f32.gmra.mrb[0].mxu0 %v304
        %v684 = vpop.f32.mrb[0].mxu0
        %v685 = vadd.f32 %v443, %v684
        %v686 = vpop.f32.mrb[0].mxu0
        %v687 = vadd.f32 %v443, %v686
        %688 = vmatprep.mubr.f32.mxu0 0.0
        %689 = vmatmul.mubr.f32.gmra.mrb[0].mxu0 %v305
        %v690 = vpop.f32.mrb[0].mxu0
        %v691 = vadd.f32 %v448, %v690
        %v692 = vpop.f32.mrb[0].mxu0
        %v693 = vadd.f32 %v448, %v692
        %694 = vmatprep.mubr.f32.mxu0 0.0
        %695 = vmatmul.mubr.f32.gmra.mrb[0].mxu0 %v306
        %v696 = vpop.f32.mrb[0].mxu0
        %v697 = vadd.f32 %v453, %v696
        %v698 = vpop.f32.mrb[0].mxu0
        %v699 = vadd.f32 %v453, %v698
        %700 = vmatprep.mubr.f32.mxu0 0.0
        %701 = vmatmul.mubr.f32.gmra.mrb[0].mxu0 %v307
        %v702 = vpop.f32.mrb[0].mxu0
        %v703 = vadd.f32 %v458, %v702
        %v704 = vpop.f32.mrb[0].mxu0
        %v705 = vadd.f32 %v458, %v704
        %706 = vmatprep.mubr.f32.mxu0 0.0
        %707 = vmatmul.mubr.f32.gmra.mrb[0].mxu0 %v308
        %v708 = vpop.f32.mrb[0].mxu0
        %v709 = vadd.f32 %v463, %v708
        %v710 = vpop.f32.mrb[0].mxu0
        %v711 = vadd.f32 %v463, %v710
        %712 = vmatprep.mubr.f32.mxu0 0.0
        %713 = vmatmul.mubr.f32.gmra.mrb[0].mxu0 %v309
        %v714 = vpop.f32.mrb[0].mxu0
        %v715 = vadd.f32 %v468, %v714
        %v716 = vpop.f32.mrb[0].mxu0
        %v717 = vadd.f32 %v468, %v716
        %718 = vmatprep.mubr.f32.mxu0 0.0
        %719 = vmatmul.mubr.f32.gmra.mrb[0].mxu0 %v310
        %v720 = vpop.f32.mrb[0].mxu0
        %v721 = vadd.f32 %v473, %v720
        %v722 = vpop.f32.mrb[0].mxu0
        %v723 = vadd.f32 %v473, %v722
        %724 = vmatprep.mubr.f32.mxu0 0.0
        %725 = vmatmul.mubr.f32.gmra.mrb[0].mxu0 %v311
        %v726 = vpop.f32.mrb[0].mxu0
        %v727 = vadd.f32 %v478, %v726
        %v728 = vpop.f32.mrb[0].mxu0
        %v729 = vadd.f32 %v478, %v728
        %730 = vmatprep.mubr.f32.mxu0 0.0
        %731 = vmatmul.mubr.f32.gmra.mrb[0].mxu0 %v312
        %v732 = vpop.f32.mrb[0].mxu0
        %v733 = vadd.f32 %v483, %v732
        %v734 = vpop.f32.mrb[0].mxu0
        %v735 = vadd.f32 %v483, %v734
        %736 = vmatprep.mubr.f32.mxu0 0.0
        %737 = vmatmul.mubr.f32.gmra.mrb[0].mxu0 %v313
        %v738 = vpop.f32.mrb[0].mxu0
        %v739 = vadd.f32 %v488, %v738
        %v740 = vpop.f32.mrb[0].mxu0
        %v741 = vadd.f32 %v488, %v740
        %742 = vmatprep.mubr.f32.mxu0 0.0
        %743 = vmatmul.mubr.f32.gmra.mrb[0].mxu0 %v314
        %v744 = vpop.f32.mrb[0].mxu0
        %v745 = vadd.f32 %v493, %v744
        %v746 = vpop.f32.mrb[0].mxu0
        %v747 = vadd.f32 %v493, %v746
        %748 = vmatprep.mubr.f32.mxu0 0.0
        %749 = vmatmul.mubr.f32.gmra.mrb[0].mxu0 %v315
        %v750 = vpop.f32.mrb[0].mxu0
        %v751 = vadd.f32 %v498, %v750
        %v752 = vpop.f32.mrb[0].mxu0
        %v753 = vadd.f32 %v498, %v752
        %754 = vmatprep.mubr.f32.mxu0 0.0
        %755 = vmatmul.mubr.f32.gmra.mrb[0].mxu0 %v316
        %v756 = vpop.f32.mrb[0].mxu0
        %v757 = vadd.f32 %v503, %v756
        %v758 = vpop.f32.mrb[0].mxu0
        %v759 = vadd.f32 %v503, %v758
        %760 = vmatprep.mubr.f32.mxu0 0.0
        %761 = vmatmul.mubr.f32.gmra.mrb[0].mxu0 %v317
        %v762 = vpop.f32.mrb[0].mxu0
        %v763 = vadd.f32 %v508, %v762
        %v764 = vpop.f32.mrb[0].mxu0
        %v765 = vadd.f32 %v508, %v764
        %766 = vdwg.mxu0
        %v767 = vmax.f32 %v577, 0.0
        %v768 = vmax.f32 %v579, 0.0
        %v769 = vmax.f32 %v583, 0.0
        %v770 = vmax.f32 %v585, 0.0
        %v771 = vmax.f32 %v589, 0.0
        %v772 = vmax.f32 %v591, 0.0
        %v773 = vmax.f32 %v595, 0.0
        %v774 = vmax.f32 %v597, 0.0
        %v775 = vmax.f32 %v601, 0.0
        %v776 = vmax.f32 %v603, 0.0
        %v777 = vmax.f32 %v607, 0.0
        %v778 = vmax.f32 %v609, 0.0
        %v779 = vmax.f32 %v613, 0.0
        %v780 = vmax.f32 %v615, 0.0
        %v781 = vmax.f32 %v619, 0.0
        %v782 = vmax.f32 %v621, 0.0
        %v783 = vmax.f32 %v625, 0.0
        %v784 = vmax.f32 %v627, 0.0
        %v785 = vmax.f32 %v631, 0.0
        %v786 = vmax.f32 %v633, 0.0
        %v787 = vmax.f32 %v637, 0.0
        %v788 = vmax.f32 %v639, 0.0
        %v789 = vmax.f32 %v643, 0.0
        %v790 = vmax.f32 %v645, 0.0
        %v791 = vmax.f32 %v649, 0.0
        %v792 = vmax.f32 %v651, 0.0
        %v793 = vmax.f32 %v655, 0.0
        %v794 = vmax.f32 %v657, 0.0
        %v795 = vmax.f32 %v661, 0.0
        %v796 = vmax.f32 %v663, 0.0
        %v797 = vmax.f32 %v667, 0.0
        %v798 = vmax.f32 %v669, 0.0
        %v799 = vmax.f32 %v673, 0.0
        %v800 = vmax.f32 %v675, 0.0
        %v801 = vmax.f32 %v679, 0.0
        %v802 = vmax.f32 %v681, 0.0
        %v803 = vmax.f32 %v685, 0.0
        %v804 = vmax.f32 %v687, 0.0
        %v805 = vmax.f32 %v691, 0.0
        %v806 = vmax.f32 %v693, 0.0
        %v807 = vmax.f32 %v697, 0.0
        %v808 = vmax.f32 %v699, 0.0
        %v809 = vmax.f32 %v703, 0.0
        %v810 = vmax.f32 %v705, 0.0
        %v811 = vmax.f32 %v709, 0.0
        %v812 = vmax.f32 %v711, 0.0
        %v813 = vmax.f32 %v715, 0.0
        %v814 = vmax.f32 %v717, 0.0
        %v815 = vmax.f32 %v721, 0.0
        %v816 = vmax.f32 %v723, 0.0
        %v817 = vmax.f32 %v727, 0.0
        %v818 = vmax.f32 %v729, 0.0
        %v819 = vmax.f32 %v733, 0.0
        %v820 = vmax.f32 %v735, 0.0
        %v821 = vmax.f32 %v739, 0.0
        %v822 = vmax.f32 %v741, 0.0
        %v823 = vmax.f32 %v745, 0.0
        %v824 = vmax.f32 %v747, 0.0
        %v825 = vmax.f32 %v751, 0.0
        %v826 = vmax.f32 %v753, 0.0
        %v827 = vmax.f32 %v757, 0.0
        %v828 = vmax.f32 %v759, 0.0
        %v829 = vmax.f32 %v763, 0.0
        %v830 = vmax.f32 %v765, 0.0
        %v831 = vld [vmem:[%s3] sm:$0xff]
        %v832 = vld [vmem:[%s3 + $0x8] sm:$0xff]
        %v833 = vld [vmem:[%s3 + $0x10] sm:$0xff]
        %v834 = vld [vmem:[%s3 + $0x18] sm:$0xff]
        %v835 = vld [vmem:[%s3 + $0x20] sm:$0xff]
        %v836 = vld [vmem:[%s3 + $0x28] sm:$0xff]
        %v837 = vld [vmem:[%s3 + $0x30] sm:$0xff]
        %v838 = vld [vmem:[%s3 + $0x38] sm:$0xff]
        %v839 = vld [vmem:[%s3 + $0x40] sm:$0xff]
        %v840 = vld [vmem:[%s3 + $0x48] sm:$0xff]
        %v841 = vld [vmem:[%s3 + $0x50] sm:$0xff]
        %v842 = vld [vmem:[%s3 + $0x58] sm:$0xff]
        %v843 = vld [vmem:[%s3 + $0x60] sm:$0xff]
        %v844 = vld [vmem:[%s3 + $0x68] sm:$0xff]
        %v845 = vld [vmem:[%s3 + $0x70] sm:$0xff]
        %v846 = vld [vmem:[%s3 + $0x78] sm:$0xff]
        %v847 = vld [vmem:[%s3 + $0x80] sm:$0xff]
        %v848 = vld [vmem:[%s3 + $0x88] sm:$0xff]
        %v849 = vld [vmem:[%s3 + $0x90] sm:$0xff]
        %v850 = vld [vmem:[%s3 + $0x98] sm:$0xff]
        %v851 = vld [vmem:[%s3 + $0xa0] sm:$0xff]
        %v852 = vld [vmem:[%s3 + $0xa8] sm:$0xff]
        %v853 = vld [vmem:[%s3 + $0xb0] sm:$0xff]
        %v854 = vld [vmem:[%s3 + $0xb8] sm:$0xff]
        %v855 = vld [vmem:[%s3 + $0xc0] sm:$0xff]
        %v856 = vld [vmem:[%s3 + $0xc8] sm:$0xff]
        %v857 = vld [vmem:[%s3 + $0xd0] sm:$0xff]
        %v858 = vld [vmem:[%s3 + $0xd8] sm:$0xff]
        %v859 = vld [vmem:[%s3 + $0xe0] sm:$0xff]
        %v860 = vld [vmem:[%s3 + $0xe8] sm:$0xff]
        %v861 = vld [vmem:[%s3 + $0xf0] sm:$0xff]
        %v862 = vld [vmem:[%s3 + $0xf8] sm:$0xff]
        %v863 = vld [vmem:[%s4] sm:$0xff]
        %v864 = vld [vmem:[%s4 + $0x8] sm:$0xff]
        %v865 = vld [vmem:[%s4 + $0x10] sm:$0xff]
        %v866 = vld [vmem:[%s4 + $0x18] sm:$0xff]
        %v867 = vld [vmem:[%s4 + $0x20] sm:$0xff]
        %v868 = vld [vmem:[%s4 + $0x28] sm:$0xff]
        %v869 = vld [vmem:[%s4 + $0x30] sm:$0xff]
        %v870 = vld [vmem:[%s4 + $0x38] sm:$0xff]
        %v871 = vld [vmem:[%s4 + $0x40] sm:$0xff]
        %v872 = vld [vmem:[%s4 + $0x48] sm:$0xff]
        %v873 = vld [vmem:[%s4 + $0x50] sm:$0xff]
        %v874 = vld [vmem:[%s4 + $0x58] sm:$0xff]
        %v875 = vld [vmem:[%s4 + $0x60] sm:$0xff]
        %v876 = vld [vmem:[%s4 + $0x68] sm:$0xff]
        %v877 = vld [vmem:[%s4 + $0x70] sm:$0xff]
        %v878 = vld [vmem:[%s4 + $0x78] sm:$0xff]
        %880 = vset.pattern.permute.xlu0 0
        %881 = vperm.xlu0 %880, %v863
        %v882 = vpop.permute.xlu0 %881
        %885 = vset.pattern.permute.xlu0 0
        %886 = vperm.xlu0 %885, %v864
        %v887 = vpop.permute.xlu0 %886
        %890 = vset.pattern.permute.xlu0 0
        %891 = vperm.xlu0 %890, %v865
        %v892 = vpop.permute.xlu0 %891
        %895 = vset.pattern.permute.xlu0 0
        %896 = vperm.xlu0 %895, %v866
        %v897 = vpop.permute.xlu0 %896
        %900 = vset.pattern.permute.xlu0 0
        %901 = vperm.xlu0 %900, %v867
        %v902 = vpop.permute.xlu0 %901
        %905 = vset.pattern.permute.xlu0 0
        %906 = vperm.xlu0 %905, %v868
        %v907 = vpop.permute.xlu0 %906
        %910 = vset.pattern.permute.xlu0 0
        %911 = vperm.xlu0 %910, %v869
        %v912 = vpop.permute.xlu0 %911
        %915 = vset.pattern.permute.xlu0 0
        %916 = vperm.xlu0 %915, %v870
        %v917 = vpop.permute.xlu0 %916
        %920 = vset.pattern.permute.xlu0 0
        %921 = vperm.xlu0 %920, %v871
        %v922 = vpop.permute.xlu0 %921
        %925 = vset.pattern.permute.xlu0 0
        %926 = vperm.xlu0 %925, %v872
        %v927 = vpop.permute.xlu0 %926
        %930 = vset.pattern.permute.xlu0 0
        %931 = vperm.xlu0 %930, %v873
        %v932 = vpop.permute.xlu0 %931
        %935 = vset.pattern.permute.xlu0 0
        %936 = vperm.xlu0 %935, %v874
        %v937 = vpop.permute.xlu0 %936
        %940 = vset.pattern.permute.xlu0 0
        %941 = vperm.xlu0 %940, %v875
        %v942 = vpop.permute.xlu0 %941
        %945 = vset.pattern.permute.xlu0 0
        %946 = vperm.xlu0 %945, %v876
        %v947 = vpop.permute.xlu0 %946
        %950 = vset.pattern.permute.xlu0 0
        %951 = vperm.xlu0 %950, %v877
        %v952 = vpop.permute.xlu0 %951
        %955 = vset.pattern.permute.xlu0 0
        %956 = vperm.xlu0 %955, %v878
        %v957 = vpop.permute.xlu0 %956
        %959 = vmatprep.subr.mxu0 %v768
        %960 = vmatpush1.msra.mxu0 %v767
        %961 = vmatprep.subr.mxu0 %v770
        %962 = vmatpush1.msra.mxu0 %v769
        %963 = vmatprep.subr.mxu0 %v772
        %964 = vmatpush1.msra.mxu0 %v771
        %965 = vmatprep.subr.mxu0 %v774
        %966 = vmatpush1.msra.mxu0 %v773
        %967 = vmatprep.subr.mxu0 %v776
        %968 = vmatpush1.msra.mxu0 %v775
        %969 = vmatprep.subr.mxu0 %v778
        %970 = vmatpush1.msra.mxu0 %v777
        %971 = vmatprep.subr.mxu0 %v780
        %972 = vmatpush1.msra.mxu0 %v779
        %973 = vmatprep.subr.mxu0 %v782
        %974 = vmatpush1.msra.mxu0 %v781
        %975 = vmatprep.subr.mxu0 %v784
        %976 = vmatpush1.msra.mxu0 %v783
        %977 = vmatprep.subr.mxu0 %v786
        %978 = vmatpush1.msra.mxu0 %v785
        %979 = vmatprep.subr.mxu0 %v788
        %980 = vmatpush1.msra.mxu0 %v787
        %981 = vmatprep.subr.mxu0 %v790
        %982 = vmatpush1.msra.mxu0 %v789
        %983 = vmatprep.subr.mxu0 %v792
        %984 = vmatpush1.msra.mxu0 %v791
        %985 = vmatprep.subr.mxu0 %v794
        %986 = vmatpush1.msra.mxu0 %v793
        %987 = vmatprep.subr.mxu0 %v796
        %988 = vmatpush1.msra.mxu0 %v795
        %989 = vmatprep.subr.mxu0 %v798
        %990 = vmatpush1.msra.mxu0 %v797
        %991 = vmatprep.subr.mxu0 %v800
        %992 = vmatpush1.msra.mxu0 %v799
        %993 = vmatprep.subr.mxu0 %v802
        %994 = vmatpush1.msra.mxu0 %v801
        %995 = vmatprep.subr.mxu0 %v804
        %996 = vmatpush1.msra.mxu0 %v803
        %997 = vmatprep.subr.mxu0 %v806
        %998 = vmatpush1.msra.mxu0 %v805
        %999 = vmatprep.subr.mxu0 %v808
        %1000 = vmatpush1.msra.mxu0 %v807
        %1001 = vmatprep.subr.mxu0 %v810
        %1002 = vmatpush1.msra.mxu0 %v809
        %1003 = vmatprep.subr.mxu0 %v812
        %1004 = vmatpush1.msra.mxu0 %v811
        %1005 = vmatprep.subr.mxu0 %v814
        %1006 = vmatpush1.msra.mxu0 %v813
        %1007 = vmatprep.subr.mxu0 %v816
        %1008 = vmatpush1.msra.mxu0 %v815
        %1009 = vmatprep.subr.mxu0 %v818
        %1010 = vmatpush1.msra.mxu0 %v817
        %1011 = vmatprep.subr.mxu0 %v820
        %1012 = vmatpush1.msra.mxu0 %v819
        %1013 = vmatprep.subr.mxu0 %v822
        %1014 = vmatpush1.msra.mxu0 %v821
        %1015 = vmatprep.subr.mxu0 %v824
        %1016 = vmatpush1.msra.mxu0 %v823
        %1017 = vmatprep.subr.mxu0 %v826
        %1018 = vmatpush1.msra.mxu0 %v825
        %1019 = vmatprep.subr.mxu0 %v828
        %1020 = vmatpush1.msra.mxu0 %v827
        %1021 = vmatprep.subr.mxu0 %v830
        %1022 = vmatpush1.msra.mxu0 %v829
        %1023 = vmatprep.mubr.f32.mxu0 %v832
        %1024 = vmatmul.mubr.f32.gmra.mrb[0].mxu0 %v831
        %v1025 = vpop.f32.mrb[0].mxu0
        %v1026 = vadd.f32 %v882, %v1025
        %v1027 = vpop.f32.mrb[0].mxu0
        %v1028 = vadd.f32 %v882, %v1027
        %1029 = vmatprep.mubr.f32.mxu0 %v834
        %1030 = vmatmul.mubr.f32.gmra.mrb[0].mxu0 %v833
        %v1031 = vpop.f32.mrb[0].mxu0
        %v1032 = vadd.f32 %v887, %v1031
        %v1033 = vpop.f32.mrb[0].mxu0
        %v1034 = vadd.f32 %v887, %v1033
        %1035 = vmatprep.mubr.f32.mxu0 %v836
        %1036 = vmatmul.mubr.f32.gmra.mrb[0].mxu0 %v835
        %v1037 = vpop.f32.mrb[0].mxu0
        %v1038 = vadd.f32 %v892, %v1037
        %v1039 = vpop.f32.mrb[0].mxu0
        %v1040 = vadd.f32 %v892, %v1039
        %1041 = vmatprep.mubr.f32.mxu0 %v838
        %1042 = vmatmul.mubr.f32.gmra.mrb[0].mxu0 %v837
        %v1043 = vpop.f32.mrb[0].mxu0
        %v1044 = vadd.f32 %v897, %v1043
        %v1045 = vpop.f32.mrb[0].mxu0
        %v1046 = vadd.f32 %v897, %v1045
        %1047 = vmatprep.mubr.f32.mxu0 %v840
        %1048 = vmatmul.mubr.f32.gmra.mrb[0].mxu0 %v839
        %v1049 = vpop.f32.mrb[0].mxu0
        %v1050 = vadd.f32 %v902, %v1049
        %v1051 = vpop.f32.mrb[0].mxu0
        %v1052 = vadd.f32 %v902, %v1051
        %1053 = vmatprep.mubr.f32.mxu0 %v842
        %1054 = vmatmul.mubr.f32.gmra.mrb[0].mxu0 %v841
        %v1055 = vpop.f32.mrb[0].mxu0
        %v1056 = vadd.f32 %v907, %v1055
        %v1057 = vpop.f32.mrb[0].mxu0
        %v1058 = vadd.f32 %v907, %v1057
        %1059 = vmatprep.mubr.f32.mxu0 %v844
        %1060 = vmatmul.mubr.f32.gmra.mrb[0].mxu0 %v843
        %v1061 = vpop.f32.mrb[0].mxu0
        %v1062 = vadd.f32 %v912, %v1061
        %v1063 = vpop.f32.mrb[0].mxu0
        %v1064 = vadd.f32 %v912, %v1063
        %1065 = vmatprep.mubr.f32.mxu0 %v846
        %1066 = vmatmul.mubr.f32.gmra.mrb[0].mxu0 %v845
        %v1067 = vpop.f32.mrb[0].mxu0
        %v1068 = vadd.f32 %v917, %v1067
        %v1069 = vpop.f32.mrb[0].mxu0
        %v1070 = vadd.f32 %v917, %v1069
        %1071 = vmatprep.mubr.f32.mxu0 %v848
        %1072 = vmatmul.mubr.f32.gmra.mrb[0].mxu0 %v847
        %v1073 = vpop.f32.mrb[0].mxu0
        %v1074 = vadd.f32 %v922, %v1073
        %v1075 = vpop.f32.mrb[0].mxu0
        %v1076 = vadd.f32 %v922, %v1075
        %1077 = vmatprep.mubr.f32.mxu0 %v850
        %1078 = vmatmul.mubr.f32.gmra.mrb[0].mxu0 %v849
        %v1079 = vpop.f32.mrb[0].mxu0
        %v1080 = vadd.f32 %v927, %v1079
        %v1081 = vpop.f32.mrb[0].mxu0
        %v1082 = vadd.f32 %v927, %v1081
        %1083 = vmatprep.mubr.f32.mxu0 %v852
        %1084 = vmatmul.mubr.f32.gmra.mrb[0].mxu0 %v851
        %v1085 = vpop.f32.mrb[0].mxu0
        %v1086 = vadd.f32 %v932, %v1085
        %v1087 = vpop.f32.mrb[0].mxu0
        %v1088 = vadd.f32 %v932, %v1087
        %1089 = vmatprep.mubr.f32.mxu0 %v854
        %1090 = vmatmul.mubr.f32.gmra.mrb[0].mxu0 %v853
        %v1091 = vpop.f32.mrb[0].mxu0
        %v1092 = vadd.f32 %v937, %v1091
        %v1093 = vpop.f32.mrb[0].mxu0
        %v1094 = vadd.f32 %v937, %v1093
        %1095 = vmatprep.mubr.f32.mxu0 %v856
        %1096 = vmatmul.mubr.f32.gmra.mrb[0].mxu0 %v855
        %v1097 = vpop.f32.mrb[0].mxu0
        %v1098 = vadd.f32 %v942, %v1097
        %v1099 = vpop.f32.mrb[0].mxu0
        %v1100 = vadd.f32 %v942, %v1099
        %1101 = vmatprep.mubr.f32.mxu0 %v858
        %1102 = vmatmul.mubr.f32.gmra.mrb[0].mxu0 %v857
        %v1103 = vpop.f32.mrb[0].mxu0
        %v1104 = vadd.f32 %v947, %v1103
        %v1105 = vpop.f32.mrb[0].mxu0
        %v1106 = vadd.f32 %v947, %v1105
        %1107 = vmatprep.mubr.f32.mxu0 %v860
        %1108 = vmatmul.mubr.f32.gmra.mrb[0].mxu0 %v859
        %v1109 = vpop.f32.mrb[0].mxu0
        %v1110 = vadd.f32 %v952, %v1109
        %v1111 = vpop.f32.mrb[0].mxu0
        %v1112 = vadd.f32 %v952, %v1111
        %1113 = vmatprep.mubr.f32.mxu0 %v862
        %1114 = vmatmul.mubr.f32.gmra.mrb[0].mxu0 %v861
        %v1115 = vpop.f32.mrb[0].mxu0
        %v1116 = vadd.f32 %v957, %v1115
        %v1117 = vpop.f32.mrb[0].mxu0
        %v1118 = vadd.f32 %v957, %v1117
        %1119 = vdwg.mxu0
        %v1120 = vadd.f32 %v1026, %v254
        %v1121 = vadd.f32 %v1028, %v255
        %v1122 = vadd.f32 %v1032, %v256
        %v1123 = vadd.f32 %v1034, %v257
        %v1124 = vadd.f32 %v1038, %v258
        %v1125 = vadd.f32 %v1040, %v259
        %v1126 = vadd.f32 %v1044, %v260
        %v1127 = vadd.f32 %v1046, %v261
        %v1128 = vadd.f32 %v1050, %v262
        %v1129 = vadd.f32 %v1052, %v263
        %v1130 = vadd.f32 %v1056, %v264
        %v1131 = vadd.f32 %v1058, %v265
        %v1132 = vadd.f32 %v1062, %v266
        %v1133 = vadd.f32 %v1064, %v267
        %v1134 = vadd.f32 %v1068, %v268
        %v1135 = vadd.f32 %v1070, %v269
        %v1136 = vadd.f32 %v1074, %v270
        %v1137 = vadd.f32 %v1076, %v271
        %v1138 = vadd.f32 %v1080, %v272
        %v1139 = vadd.f32 %v1082, %v273
        %v1140 = vadd.f32 %v1086, %v274
        %v1141 = vadd.f32 %v1088, %v275
        %v1142 = vadd.f32 %v1092, %v276
        %v1143 = vadd.f32 %v1094, %v277
        %v1144 = vadd.f32 %v1098, %v278
        %v1145 = vadd.f32 %v1100, %v279
        %v1146 = vadd.f32 %v1104, %v280
        %v1147 = vadd.f32 %v1106, %v281
        %v1148 = vadd.f32 %v1110, %v282
        %v1149 = vadd.f32 %v1112, %v283
        %v1150 = vadd.f32 %v1116, %v284
        %v1151 = vadd.f32 %v1118, %v285
        %1152 = vst [vmem:[%s242] sm:$0xff] %v1120
        %1153 = vst [vmem:[%s242 + $0x8] sm:$0xff] %v1121
        %1154 = vst [vmem:[%s242 + $0x10] sm:$0xff] %v1122
        %1155 = vst [vmem:[%s242 + $0x18] sm:$0xff] %v1123
        %1156 = vst [vmem:[%s242 + $0x20] sm:$0xff] %v1124
        %1157 = vst [vmem:[%s242 + $0x28] sm:$0xff] %v1125
        %1158 = vst [vmem:[%s242 + $0x30] sm:$0xff] %v1126
        %1159 = vst [vmem:[%s242 + $0x38] sm:$0xff] %v1127
        %1160 = vst [vmem:[%s242 + $0x40] sm:$0xff] %v1128
        %1161 = vst [vmem:[%s242 + $0x48] sm:$0xff] %v1129
        %1162 = vst [vmem:[%s242 + $0x50] sm:$0xff] %v1130
        %1163 = vst [vmem:[%s242 + $0x58] sm:$0xff] %v1131
        %1164 = vst [vmem:[%s242 + $0x60] sm:$0xff] %v1132
        %1165 = vst [vmem:[%s242 + $0x68] sm:$0xff] %v1133
        %1166 = vst [vmem:[%s242 + $0x70] sm:$0xff] %v1134
        %1167 = vst [vmem:[%s242 + $0x78] sm:$0xff] %v1135
        %1168 = vst [vmem:[%s242 + $0x80] sm:$0xff] %v1136
        %1169 = vst [vmem:[%s242 + $0x88] sm:$0xff] %v1137
        %1170 = vst [vmem:[%s242 + $0x90] sm:$0xff] %v1138
        %1171 = vst [vmem:[%s242 + $0x98] sm:$0xff] %v1139
        %1172 = vst [vmem:[%s242 + $0xa0] sm:$0xff] %v1140
        %1173 = vst [vmem:[%s242 + $0xa8] sm:$0xff] %v1141
        %1174 = vst [vmem:[%s242 + $0xb0] sm:$0xff] %v1142
        %1175 = vst [vmem:[%s242 + $0xb8] sm:$0xff] %v1143
        %1176 = vst [vmem:[%s242 + $0xc0] sm:$0xff] %v1144
        %1177 = vst [vmem:[%s242 + $0xc8] sm:$0xff] %v1145
        %1178 = vst [vmem:[%s242 + $0xd0] sm:$0xff] %v1146
        %1179 = vst [vmem:[%s242 + $0xd8] sm:$0xff] %v1147
        %1180 = vst [vmem:[%s242 + $0xe0] sm:$0xff] %v1148
        %1181 = vst [vmem:[%s242 + $0xe8] sm:$0xff] %v1149
        %1182 = vst [vmem:[%s242 + $0xf0] sm:$0xff] %v1150
        %1183 = vst [vmem:[%s242 + $0xf8] sm:$0xff] %v1151
        %s1184 = sand.u32 %s153, 1
        %s1185 = scalar_lea.sflag [#allocation3], %s1184
        %s1186 = sand.u32 %s153, 1
        %s1187 = smul.addr %s1186, 256
        %s1188 = scalar_lea.vmem [#allocation2], %s1187
        // Predicated region
        $region41: #{ffn_pallas.1} parent=39 // pred_check
          %p1189 = pneg %p163
        $region42: #{ffn_pallas.1} parent=39 // pred_check_branch
          %1191 = sbr.rel (%p1189) target = $region44
        $region43: #{ffn_pallas.1} parent=39 // pred_region
          %s1192 = smul.u32 2, %s24
          %s1194 = ssub.s32 4096, 4096
          %1195 = vsyncadd %s1185, %s1194
          %s1196 = smul.addr %s23, 32
          %s1197 = sadd.s32 %s1192, %s1196
          %s1198 = smul.addr %s1197, 128
          %s1199 = scalar_lea.hbm %s5, %s1198
          %s1200 = sshll.u32 %s1188, 4
          %s1201 = int_to_ptr.vmem [resolvable:$true] %s1200
          %1206 = dma.vmem_to_hbm [thread:$0]  %s1201, 4096, %s1199, %s1185, 256, 256, 16
        $region44: #{ffn_pallas.1} parent=39 // pred_fallthru
          _
      $region40: #{ffn_pallas.1} parent=5 // pred_fallthru
        _
      %p1207 = scmp.le.s32.totalorder 2, %s14
      // Predicated region
      $region45: #{ffn_pallas.1} parent=5 // pred_check
        %p1208 = pneg %p1207
      $region46: #{ffn_pallas.1} parent=5 // pred_check_branch
        %1210 = sbr.rel (%p1208) target = $region48
      $region47: #{ffn_pallas.1} parent=5 // pred_region
        %s1211 = ssub.s32 %s14, 2
        // Predicated region
        $region49: #{ffn_pallas.1} parent=47 // pred_check
          %p1212 = pneg %p169
        $region50: #{ffn_pallas.1} parent=47 // pred_check_branch
          %1214 = sbr.rel (%p1212) target = $region52
        $region51: #{ffn_pallas.1} parent=47 // pred_region
          %s1215 = sand.u32 %s154, 1
          %s1216 = scalar_lea.sflag [#allocation3], %s1215
          %s1217 = sand.u32 %s154, 1
          %s1218 = smul.addr %s1217, 256
          %s1219 = scalar_lea.vmem [#allocation2], %s1218
          %1220 = dma.done %s1216, 4096
        $region52: #{ffn_pallas.1} parent=47 // pred_fallthru
          _
      $region48: #{ffn_pallas.1} parent=5 // pred_fallthru
        _
    $region6: #{ffn_pallas.1} parent=1 // loop_footer
      %s18 = sadd.s32 1, %s14
    $region7: #{ffn_pallas.1} parent=1 // loop_footer_branch
      %13 = sbr.rel target = $region3
    $region8: #{ffn_pallas.1} parent=1 // loop_exit
      _
    %1221 = vsyncpa [#allocation3], 1
    %s1222 = scalar_lea.sflag [#allocation3], 1
    %1223 = vsyncpa %s1222, 1

</llo_original>
